<compile_context>
chip_gen: v6e
topology: v6e:2x2x1
jax: 0.10.0
libtpu: 0.0.40
codegen_flags: <defaults>
</compile_context>

<pallas_src>
import functools
from typing import NamedTuple, Optional

import jax
import jax.numpy as jnp
from jax.experimental import pallas as pl
from jax.experimental.pallas import tpu as pltpu


# --------------------------------------------------------------------------
# Helpers
# --------------------------------------------------------------------------
def _round_up(x: int, m: int) -> int:
    return (x + m - 1) // m * m


def _cdiv(a: int, b: int) -> int:
    return -(-a // b)


def choose_tn(dim_out: int, *, tn_max: int = 1024, min_blocks: int = 2) -> int:
    """Output tile width (multiple of 128). Prefers >=min_blocks N tiles so both
    v7x TensorCores get work even when M fits in a single row tile (decode)."""
    n128 = _round_up(dim_out, 128)
    tn = min(tn_max, n128)
    if min_blocks > 1 and n128 >= min_blocks * 128 and _cdiv(n128, tn) < min_blocks:
        tn = _round_up(_cdiv(n128, min_blocks), 128)
    return tn


def choose_tk(dim_in: int, *, tk_max: int = 1024) -> int:
    """Reduction tile (multiple of 128) so that K padded to a multiple of tk
    stays close to dim_in (minimal zero-padding, no tk collapse)."""
    k128 = _round_up(dim_in, 128)
    n_steps = _cdiv(k128, tk_max)
    return _round_up(_cdiv(k128, n_steps), 128)


class GegluParams(NamedTuple):
    w_fused: jax.Array   # (k_pad, 2*n_pad); each 2*tn column block = [val | gate]
    b_fused: jax.Array   # (1, 2*n_pad) float32, same interleaving
    dim_in: int
    dim_out: int
    tn: int
    tk: int


def prepare_geglu_params(weight, bias, *, tn=None, tk=None,
                         tn_max=1024, tk_max=1024, dtype=None) -> GegluParams:
    """One-time (per-model) layout prep. Call OUTSIDE the per-token jit path.

    weight: (2*dim_out, dim_in)  -- nn.Linear weight (PyTorch layout)
    bias:   (2*dim_out,)
    dtype:  optional matmul dtype for the weight (e.g. jnp.bfloat16).
            Accumulation / bias / gelu epilogue always stay f32.
    """
    two_dim_out, dim_in = weight.shape
    assert two_dim_out % 2 == 0
    dim_out = two_dim_out // 2

    if tn is None:
        tn = choose_tn(dim_out, tn_max=tn_max)
    if tk is None:
        tk = choose_tk(dim_in, tk_max=tk_max)
    assert tn % 128 == 0 and tk % 128 == 0

    n_pad = _round_up(dim_out, tn)
    k_pad = _round_up(_round_up(dim_in, 128), tk)   # K padded to a multiple of tk

    if dtype is not None:
        weight = weight.astype(dtype)

    pad_nk = ((0, n_pad - dim_out), (0, k_pad - dim_in))
    wv = jnp.pad(weight[:dim_out], pad_nk)   # value half, (n_pad, k_pad)
    wg = jnp.pad(weight[dim_out:], pad_nk)   # gate  half, (n_pad, k_pad)

    # Interleave so each 2*tn column block is [value_tile_j | gate_tile_j].
    wv_t = wv.T.reshape(k_pad, n_pad // tn, tn)
    wg_t = wg.T.reshape(k_pad, n_pad // tn, tn)
    w_fused = jnp.concatenate([wv_t, wg_t], axis=-1).reshape(k_pad, 2 * n_pad)

    bias = bias.astype(jnp.float32)
    bv = jnp.pad(bias[:dim_out], (0, n_pad - dim_out)).reshape(n_pad // tn, tn)
    bg = jnp.pad(bias[dim_out:], (0, n_pad - dim_out)).reshape(n_pad // tn, tn)
    b_fused = jnp.concatenate([bv, bg], axis=-1).reshape(1, 2 * n_pad)

    return GegluParams(w_fused, b_fused, int(dim_in), int(dim_out), int(tn), int(tk))


# --------------------------------------------------------------------------
# Kernels
# --------------------------------------------------------------------------
_INV_SQRT2 = 0.7071067811865476


def _erf_gelu(g):
    # Exact (erf) GELU -> matches torch.nn.functional.gelu default.
    return 0.5 * g * (1.0 + jax.lax.erf(g * jnp.float32(_INV_SQRT2)))


def _geglu_tiled_kernel(x_ref, w_ref, b_ref, o_ref, acc_ref):
    """General (M, N, K) tiled path with f32 accumulator (K innermost)."""
    k = pl.program_id(2)

    @pl.when(k == 0)
    def _init():
        # Fold bias into accumulator init: saves a full (tm, 2*tn) f32 temp
        # and one VPU pass in the epilogue.
        acc_ref[...] = jnp.broadcast_to(b_ref[...], acc_ref.shape)

    # Single fused matmul produces [value | gate] for this (M, N) tile.
    acc_ref[...] += jnp.dot(x_ref[...], w_ref[...],
                            preferred_element_type=jnp.float32)

    @pl.when(k == pl.num_programs(2) - 1)
    def _finalize():
        tn = o_ref.shape[-1]
        h = acc_ref[:, :tn]
        g = acc_ref[:, tn:]
        o_ref[...] = (h * _erf_gelu(g)).astype(o_ref.dtype)


def _geglu_resident_kernel(x_ref, w_ref, b_ref, o_ref, *, tn, n_blocks):
    """Weight-resident path: the whole fused weight lives in VMEM (DMA'd once,
    constant index_map); grid runs over M only and we loop N tiles in-kernel."""
    x = x_ref[...]
    for j in range(n_blocks):
        wj = w_ref[:, 2 * tn * j:2 * tn * (j + 1)]
        y = jnp.dot(x, wj, preferred_element_type=jnp.float32)
        y = y + b_ref[:, 2 * tn * j:2 * tn * (j + 1)]
        h = y[:, :tn]
        g = y[:, tn:]
        o_ref[:, tn * j:tn * (j + 1)] = (h * _erf_gelu(g)).astype(o_ref.dtype)


# --------------------------------------------------------------------------
# Wrapper
# --------------------------------------------------------------------------
@functools.partial(
    jax.jit,
    static_argnames=("dim_in", "dim_out", "tn", "tk", "tm", "out_dtype",
                     "weight_resident_max_bytes"))
def _geglu_impl(x, w_fused, b_fused, *, dim_in, dim_out, tn, tk, tm,
                out_dtype, weight_resident_max_bytes):
    out_dtype = jnp.dtype(out_dtype)
    orig_shape = x.shape

    k_pad, two_n_pad = w_fused.shape
    n_pad = two_n_pad // 2
    if n_pad % tn != 0 or k_pad % tk != 0:
        raise ValueError("w_fused layout does not match (tn, tk)")
    n_blocks = n_pad // tn
    k_steps = k_pad // tk

    x2d = x.reshape(-1, dim_in)
    m = x2d.shape[0]

    # Cast activations to the matmul dtype (bf16/fp8 weight path) once.
    if x2d.dtype != w_fused.dtype:
        x2d = x2d.astype(w_fused.dtype)
    # Zero-pad K only. Never rely on OOB garbage along the reduction axis:
    # NaN * 0-weight would poison the accumulator.
    if dim_in != k_pad:
        x2d = jnp.pad(x2d, ((0, 0), (0, k_pad - dim_in)))

    in_b = jnp.dtype(w_fused.dtype).itemsize
    out_b = out_dtype.itemsize
    sub = {4: 8, 2: 16, 1: 32}.get(in_b, 8)          # sublane packing of x tile
    tm_eff = _round_up(min(tm, _round_up(m, sub)), sub)
    m_blocks = _cdiv(m, tm_eff)                       # partial last M block is OK

    w_bytes = k_pad * two_n_pad * in_b
    resident = w_bytes <= weight_resident_max_bytes

    if resident:
        est = (2 * w_bytes                             # weight (buffered)
               + 2 * tm_eff * k_pad * in_b             # x tiles
               + 2 * two_n_pad * 4                     # bias
               + 2 * tm_eff * n_pad * out_b            # out tiles
               + tm_eff * 2 * tn * 4)                  # per-j f32 temp headroom
    else:
        est = (tm_eff * 2 * tn * 4                     # f32 accumulator
               + 2 * tm_eff * tk * in_b                # x tiles
               + 2 * tk * 2 * tn * in_b                # weight tiles
               + 2 * 2 * tn * 4                        # bias
               + 2 * tm_eff * tn * out_b)              # out tiles
    vmem_limit = int(min(128 * 1024 * 1024, max(48 * 1024 * 1024, est * 3 // 2)))

    if resident:
        kernel = functools.partial(_geglu_resident_kernel, tn=tn, n_blocks=n_blocks)
        out = pl.pallas_call(
            kernel,
            out_shape=jax.ShapeDtypeStruct((m, n_pad), out_dtype),
            grid_spec=pltpu.PrefetchScalarGridSpec(
                num_scalar_prefetch=0,
                grid=(m_blocks,),
                in_specs=[
                    pl.BlockSpec((tm_eff, k_pad), lambda i: (i, 0)),
                    pl.BlockSpec((k_pad, two_n_pad), lambda i: (0, 0)),  # loaded once
                    pl.BlockSpec((1, two_n_pad), lambda i: (0, 0)),
                ],
                out_specs=pl.BlockSpec((tm_eff, n_pad), lambda i: (i, 0)),
            ),
            compiler_params=pltpu.CompilerParams(
                dimension_semantics=("parallel",),
                vmem_limit_bytes=vmem_limit,
            ),
        )(x2d, w_fused, b_fused)
    else:
        out = pl.pallas_call(
            _geglu_tiled_kernel,
            out_shape=jax.ShapeDtypeStruct((m, n_pad), out_dtype),
            grid_spec=pltpu.PrefetchScalarGridSpec(
                num_scalar_prefetch=0,
                grid=(m_blocks, n_blocks, k_steps),
                in_specs=[
                    pl.BlockSpec((tm_eff, tk), lambda i, j, k: (i, k)),
                    pl.BlockSpec((tk, 2 * tn), lambda i, j, k: (k, j)),
                    pl.BlockSpec((1, 2 * tn), lambda i, j, k: (0, j)),
                ],
                out_specs=pl.BlockSpec((tm_eff, tn), lambda i, j, k: (i, j)),
                scratch_shapes=[pltpu.VMEM((tm_eff, 2 * tn), jnp.float32)],
            ),
            compiler_params=pltpu.CompilerParams(
                dimension_semantics=("parallel", "parallel", "arbitrary"),
                vmem_limit_bytes=vmem_limit,
            ),
        )(x2d, w_fused, b_fused)

    if n_pad != dim_out:
        out = out[:, :dim_out]
    return out.reshape(*orig_shape[:-1], dim_out)


def geglu(x, params: GegluParams, *, tm: int = 512,
          out_dtype: Optional[jnp.dtype] = None,
          weight_resident_max_bytes: int = 16 * 1024 * 1024):
    """GEGLU forward. x: (..., dim_in); params from prepare_geglu_params.

    tm:  row tile (default 512; use 1024 for large-M FFN shapes on v6e/v7x,
         512 is already at the compute roofline on v5e).
    out_dtype: output dtype (defaults to x.dtype); emit bf16 to halve HBM writes.
    weight_resident_max_bytes: fused-weight size under which the whole weight is
         kept resident in VMEM (DMA'd once) instead of streamed per M block.
    """
    if x.shape[-1] != params.dim_in:
        raise ValueError(
            f"x last dim {x.shape[-1]} != dim_in {params.dim_in} used at prep time")
    out_dtype = jnp.dtype(x.dtype if out_dtype is None else out_dtype)
    return _geglu_impl(
        x, params.w_fused, params.b_fused,
        dim_in=params.dim_in, dim_out=params.dim_out,
        tn=params.tn, tk=params.tk, tm=int(tm),
        out_dtype=out_dtype.name,
        weight_resident_max_bytes=int(weight_resident_max_bytes))


# --------------------------------------------------------------------------
# Self-test
# --------------------------------------------------------------------------
if __name__ == "__main__":
    def geglu_ref(x, weight, bias):
        proj = x @ weight.T + bias
        h, g = jnp.split(proj, 2, axis=-1)
        return h * jax.nn.gelu(g, approximate=False)   # exact erf gelu (torch default)

    key = jax.random.PRNGKey(0)

    # ---- Case 1: module-sized GEGLU (dim_in=32, dim_out=32), batch=2, seq=8.
    dim_in, dim_out = 32, 32
    batch, seq = 2, 8
    k1, k2, k3, key = jax.random.split(key, 4)
    x = jax.random.normal(k1, (batch, seq, dim_in), dtype=jnp.float32)
    weight = jax.random.normal(k2, (2 * dim_out, dim_in), dtype=jnp.float32) * 0.05
    bias = jax.random.normal(k3, (2 * dim_out,), dtype=jnp.float32) * 0.05
    ref = geglu_ref(x, weight, bias)

    params = prepare_geglu_params(weight, bias)            # f32, weight-resident path
    out = jax.block_until_ready(geglu(x, params))
    assert out.shape == (batch, seq, dim_out)
    assert jnp.allclose(out, ref, atol=1e-5, rtol=1e-5)

    # Same layer forced through the general tiled (M, N, K) path.
    out_tiled = jax.block_until_ready(geglu(x, params, weight_resident_max_bytes=0))
    assert jnp.allclose(out_tiled, ref, atol=1e-5, rtol=1e-5)

    # ---- Case 2: multiple N tiles, multiple K steps, partial (ragged) M block.
    dim_in2, dim_out2 = 256, 384
    m2 = 40                                                # not a multiple of tm
    k1, k2, k3, key = jax.random.split(key, 4)
    x2 = jax.random.normal(k1, (m2, dim_in2), dtype=jnp.float32)
    w2 = jax.random.normal(k2, (2 * dim_out2, dim_in2), dtype=jnp.float32) * 0.03
    b2 = jax.random.normal(k3, (2 * dim_out2,), dtype=jnp.float32) * 0.03
    ref2 = geglu_ref(x2, w2, b2)

    params2 = prepare_geglu_params(w2, b2, tk=128)         # 2 K steps, 2 N blocks
    out2 = jax.block_until_ready(
        geglu(x2, params2, tm=32, weight_resident_max_bytes=0))
    assert out2.shape == (m2, dim_out2)
    assert jnp.allclose(out2, ref2, atol=1e-4, rtol=1e-3)

    # ---- Case 3: bf16 matmul path (full-rate MXU); f32 accumulate + erf epilogue.
    params_bf16 = prepare_geglu_params(weight, bias, dtype=jnp.bfloat16)
    out_bf16 = jax.block_until_ready(geglu(x, params_bf16))
    assert jnp.allclose(out_bf16, ref, atol=1e-2, rtol=1e-2)

    print("KERNEL_OK")
</pallas_src>

<mosaic_0001>
module attributes {stable_mosaic.version = 11 : i64} {
  func.func @_geglu_resident_kernel(%arg0: i32, %arg1: memref<16x128xf32, #tpu.memory_space<vmem>>, %arg2: memref<128x256xf32, #tpu.memory_space<vmem>>, %arg3: memref<1x256xf32, #tpu.memory_space<vmem>>, %arg4: memref<16x128xf32, #tpu.memory_space<vmem>>) attributes {dimension_semantics = [#tpu.dimension_semantics<parallel>], iteration_bounds = array<i64: 1>, scalar_prefetch = 0 : i64, scratch_operands = 0 : i64, tpu.core_type = #tpu.core_type<tc>, window_params = [{transform_indices = @transform_0, window_bounds = array<i64: 16, 128>}, {pipeline_mode = #tpu.pipeline_mode<synchronous>, transform_indices = @transform_1, window_bounds = array<i64: 128, 256>}, {pipeline_mode = #tpu.pipeline_mode<synchronous>, transform_indices = @transform_2, window_bounds = array<i64: 1, 256>}, {transform_indices = @transform_3, window_bounds = array<i64: 16, 128>}]} {
    %c0 = arith.constant 0 : index
    %c0_0 = arith.constant 0 : index
    %0 = vector.load %arg1[%c0, %c0_0] : memref<16x128xf32, #tpu.memory_space<vmem>>, vector<16x128xf32>
    %c0_1 = arith.constant 0 : index
    %c0_2 = arith.constant 0 : index
    %1 = vector.load %arg2[%c0_1, %c0_2] : memref<128x256xf32, #tpu.memory_space<vmem>>, vector<128x256xf32>
    %cst = arith.constant dense<0.000000e+00> : vector<16x256xf32>
    %2 = tpu.matmul %0, %1, %cst {dimension_numbers = #tpu.dot_dimension_numbers<[1], [0], [0], [1], [0, 0, 1, 1], [], []>} : vector<16x128xf32>, vector<128x256xf32>, vector<16x256xf32> -> vector<16x256xf32>
    %c0_3 = arith.constant 0 : index
    %c0_4 = arith.constant 0 : index
    %3 = vector.load %arg3[%c0_3, %c0_4] : memref<1x256xf32, #tpu.memory_space<vmem>>, vector<1x256xf32>
    %4 = vector.broadcast %3 : vector<1x256xf32> to vector<16x256xf32>
    %5 = arith.addf %2, %4 : vector<16x256xf32>
    %6 = vector.extract_strided_slice %5 {offsets = [0, 0], sizes = [16, 128], strides = [1, 1]} : vector<16x256xf32> to vector<16x128xf32>
    %7 = vector.extract_strided_slice %5 {offsets = [0, 128], sizes = [16, 128], strides = [1, 1]} : vector<16x256xf32> to vector<16x128xf32>
    %cst_5 = arith.constant 5.000000e-01 : f32
    %8 = vector.broadcast %cst_5 : f32 to vector<16x128xf32>
    %9 = arith.mulf %8, %7 : vector<16x128xf32>
    %cst_6 = arith.constant 0.707106769 : f32
    %10 = vector.broadcast %cst_6 : f32 to vector<16x128xf32>
    %11 = arith.mulf %7, %10 : vector<16x128xf32>
    %12 = math.erf %11 : vector<16x128xf32>
    %cst_7 = arith.constant 1.000000e+00 : f32
    %13 = vector.broadcast %cst_7 : f32 to vector<16x128xf32>
    %14 = arith.addf %13, %12 : vector<16x128xf32>
    %15 = arith.mulf %9, %14 : vector<16x128xf32>
    %16 = arith.mulf %6, %15 : vector<16x128xf32>
    %c0_8 = arith.constant 0 : index
    %c0_9 = arith.constant 0 : index
    %17 = vector.load %arg4[%c0_8, %c0_9] : memref<16x128xf32, #tpu.memory_space<vmem>>, vector<16x128xf32>
    tpu.vector_store %arg4[%c0_8, %c0_9], %16 {strides = array<i32>} : memref<16x128xf32, #tpu.memory_space<vmem>>, vector<16x128xf32>,
    return
  }
  func.func @transform_0(%arg0: i32) -> (i32, i32) {
    %c0_i32 = arith.constant 0 : i32
    %c0_i32_0 = arith.constant 0 : i32
    return %arg0, %c0_i32 : i32, i32
  }
  func.func @transform_1(%arg0: i32) -> (i32, i32) {
    %c0_i32 = arith.constant 0 : i32
    %c0_i32_0 = arith.constant 0 : i32
    %c0_i32_1 = arith.constant 0 : i32
    return %c0_i32, %c0_i32_0 : i32, i32
  }
  func.func @transform_2(%arg0: i32) -> (i32, i32) {
    %c0_i32 = arith.constant 0 : i32
    %c0_i32_0 = arith.constant 0 : i32
    %c0_i32_1 = arith.constant 0 : i32
    return %c0_i32, %c0_i32_0 : i32, i32
  }
  func.func @transform_3(%arg0: i32) -> (i32, i32) {
    %c0_i32 = arith.constant 0 : i32
    %c0_i32_0 = arith.constant 0 : i32
    return %arg0, %c0_i32 : i32, i32
  }
}

</mosaic_0001>

<llo_original>
// kernel: _geglu_impl.1
$region0: #{_geglu_impl.1}
  #allocation0 [shape = 'u32[]', space=smem, size = 0x4, offset = 0x4, fixed_abs, tag = 'smem constant byte address 0x4 - core index']
  #allocation1 [shape = 'u32[144,128]{1,0:T(1,128)}', space=vmem, size = 0x12000, scoped, tag = 'internal scratch']
  %s0 = inlined_call_operand.vmem [shape: f32[16,128], index: 0, kind: input, shape index: {}]
  %s1 = inlined_call_operand.hbm [shape: f32[128,256], index: 1, kind: input, shape index: {}]
  %s2 = inlined_call_operand.vmem [shape: f32[1,256], index: 2, kind: input, shape index: {}]
  %s3 = inlined_call_operand.vmem [shape: f32[16,128], index: 3, kind: output, shape index: {}]
  %s4 = sld [smem:[#allocation0]]
  $region26: #{_geglu_impl.1} parent=0
    _
  %s6 = ssub.s32 1, %s4
  %s7 = scalar_select 0, %s6, %s4
  $region1: #{_geglu_impl.1} parent=0
    #allocation2 [shape = 'u8[131072]{0}', space=vmem, size = 0x20000, scoped, tag = 'input window, operand 1, single buffered']
    #allocation3 [shape = 's32[1]{0}', space=sflag, size = 0x4, scoped, tag = 'scoped memory for _geglu_impl.1']
    %8 = vsyncpa [#allocation3], 0
    // Predicated region
    $region2: #{_geglu_impl.1} parent=1 // pred_check
      _
    $region3: #{_geglu_impl.1} parent=1 // pred_check_branch
      %10 = sbr.rel (0) target = $region5
    $region4: #{_geglu_impl.1} parent=1 // pred_region
      _
    $region5: #{_geglu_impl.1} parent=1 // pred_fallthru
      _
    // Predicated region
    $region6: #{_geglu_impl.1} parent=1 // pred_check
      _
    $region7: #{_geglu_impl.1} parent=1 // pred_check_branch
      %12 = sbr.rel (0) target = $region9
    $region8: #{_geglu_impl.1} parent=1 // pred_region
      %s14 = ssub.s32 4096, 4096
      %15 = vsyncadd [#allocation3], %s14
      %s16 = sshll.u32 [#allocation2], 4
      %s17 = int_to_ptr.vmem [resolvable:$true] %s16
      %22 = dma.hbm_to_vmem [thread:$0]  %s1, 4096, %s17, [#allocation3], 256, 256, 16
    $region9: #{_geglu_impl.1} parent=1 // pred_fallthru
      _
    // Predicated region
    $region10: #{_geglu_impl.1} parent=1 // pred_check
      _
    $region11: #{_geglu_impl.1} parent=1 // pred_check_branch
      %24 = sbr.rel (0) target = $region13
    $region12: #{_geglu_impl.1} parent=1 // pred_region
      _
    $region13: #{_geglu_impl.1} parent=1 // pred_fallthru
      _
    // Predicated region
    $region14: #{_geglu_impl.1} parent=1 // pred_check
      _
    $region15: #{_geglu_impl.1} parent=1 // pred_check_branch
      %26 = sbr.rel (0) target = $region17
    $region16: #{_geglu_impl.1} parent=1 // pred_region
      %27 = dma.done [#allocation3], 4096
    $region17: #{_geglu_impl.1} parent=1 // pred_fallthru
      _
    %v28 = vld [vmem:[%s0] sm:$0xff]
    %v29 = vld [vmem:[%s0 + $0x8] sm:$0xff]
    %v30 = vld [vmem:[#allocation2] sm:$0xff]
    %v31 = vld [vmem:[#allocation2 + $0x8] sm:$0xff]
    %v32 = vld [vmem:[#allocation2 + $0x10] sm:$0xff]
    %v33 = vld [vmem:[#allocation2 + $0x18] sm:$0xff]
    %v34 = vld [vmem:[#allocation2 + $0x20] sm:$0xff]
    %v35 = vld [vmem:[#allocation2 + $0x28] sm:$0xff]
    %v36 = vld [vmem:[#allocation2 + $0x30] sm:$0xff]
    %v37 = vld [vmem:[#allocation2 + $0x38] sm:$0xff]
    %v38 = vld [vmem:[#allocation2 + $0x40] sm:$0xff]
    %v39 = vld [vmem:[#allocation2 + $0x48] sm:$0xff]
    %v40 = vld [vmem:[#allocation2 + $0x50] sm:$0xff]
    %v41 = vld [vmem:[#allocation2 + $0x58] sm:$0xff]
    %v42 = vld [vmem:[#allocation2 + $0x60] sm:$0xff]
    %v43 = vld [vmem:[#allocation2 + $0x68] sm:$0xff]
    %v44 = vld [vmem:[#allocation2 + $0x70] sm:$0xff]
    %v45 = vld [vmem:[#allocation2 + $0x78] sm:$0xff]
    %v46 = vld [vmem:[#allocation2 + $0x80] sm:$0xff]
    %v47 = vld [vmem:[#allocation2 + $0x88] sm:$0xff]
    %v48 = vld [vmem:[#allocation2 + $0x90] sm:$0xff]
    %v49 = vld [vmem:[#allocation2 + $0x98] sm:$0xff]
    %v50 = vld [vmem:[#allocation2 + $0xa0] sm:$0xff]
    %v51 = vld [vmem:[#allocation2 + $0xa8] sm:$0xff]
    %v52 = vld [vmem:[#allocation2 + $0xb0] sm:$0xff]
    %v53 = vld [vmem:[#allocation2 + $0xb8] sm:$0xff]
    %v54 = vld [vmem:[#allocation2 + $0xc0] sm:$0xff]
    %v55 = vld [vmem:[#allocation2 + $0xc8] sm:$0xff]
    %v56 = vld [vmem:[#allocation2 + $0xd0] sm:$0xff]
    %v57 = vld [vmem:[#allocation2 + $0xd8] sm:$0xff]
    %v58 = vld [vmem:[#allocation2 + $0xe0] sm:$0xff]
    %v59 = vld [vmem:[#allocation2 + $0xe8] sm:$0xff]
    %v60 = vld [vmem:[#allocation2 + $0xf0] sm:$0xff]
    %v61 = vld [vmem:[#allocation2 + $0xf8] sm:$0xff]
    %v62 = vld [vmem:[%s2] sm:$0x3]
    %v64 = vlaneseq
    %v65 = vshrl.u32 %v64, 7
    %v66 = vsub.s32 0, %v65
    %v67 = vrot.slane %v62, %v66
    %v68 = vlaneseq
    %v69 = vshrl.u32 %v68, 7
    %v70 = vsub.s32 1, %v69
    %v71 = vrot.slane %v62, %v70
    %74 = vmatprep.subr.mxu0 %v61
    %75 = vmatpush1.msra.mxu0 %v60
    %76 = vmatprep.subr.mxu0 %v59
    %77 = vmatpush1.msra.mxu0 %v58
    %78 = vmatprep.subr.mxu0 %v57
    %79 = vmatpush1.msra.mxu0 %v56
    %80 = vmatprep.subr.mxu0 %v55
    %81 = vmatpush1.msra.mxu0 %v54
    %82 = vmatprep.subr.mxu0 %v53
    %83 = vmatpush1.msra.mxu0 %v52
    %84 = vmatprep.subr.mxu0 %v51
    %85 = vmatpush1.msra.mxu0 %v50
    %86 = vmatprep.subr.mxu0 %v49
    %87 = vmatpush1.msra.mxu0 %v48
    %88 = vmatprep.subr.mxu0 %v47
    %89 = vmatpush1.msra.mxu0 %v46
    %90 = vmatprep.subr.mxu0 %v45
    %91 = vmatpush1.msra.mxu0 %v44
    %92 = vmatprep.subr.mxu0 %v43
    %93 = vmatpush1.msra.mxu0 %v42
    %94 = vmatprep.subr.mxu0 %v41
    %95 = vmatpush1.msra.mxu0 %v40
    %96 = vmatprep.subr.mxu0 %v39
    %97 = vmatpush1.msra.mxu0 %v38
    %98 = vmatprep.subr.mxu0 %v37
    %99 = vmatpush1.msra.mxu0 %v36
    %100 = vmatprep.subr.mxu0 %v35
    %101 = vmatpush1.msra.mxu0 %v34
    %102 = vmatprep.subr.mxu0 %v33
    %103 = vmatpush1.msra.mxu0 %v32
    %104 = vmatprep.subr.mxu0 %v31
    %105 = vmatpush1.msra.mxu0 %v30
    %106 = vmatprep.subr.mxu0 0.0
    %107 = vmatpush2.msra.mxu0 0.0
    %108 = vmatprep.subr.mxu0 0.0
    %109 = vmatpush2.msra.mxu0 0.0
    %110 = vmatprep.subr.mxu0 0.0
    %111 = vmatpush2.msra.mxu0 0.0
    %112 = vmatprep.subr.mxu0 0.0
    %113 = vmatpush2.msra.mxu0 0.0
    %114 = vmatprep.subr.mxu0 0.0
    %115 = vmatpush2.msra.mxu0 0.0
    %116 = vmatprep.subr.mxu0 0.0
    %117 = vmatpush2.msra.mxu0 0.0
    %118 = vmatprep.subr.mxu0 0.0
    %119 = vmatpush2.msra.mxu0 0.0
    %120 = vmatprep.subr.mxu0 0.0
    %121 = vmatpush2.msra.mxu0 0.0
    %122 = vmatprep.subr.mxu0 0.0
    %123 = vmatpush2.msra.mxu0 0.0
    %124 = vmatprep.subr.mxu0 0.0
    %125 = vmatpush2.msra.mxu0 0.0
    %126 = vmatprep.subr.mxu0 0.0
    %127 = vmatpush2.msra.mxu0 0.0
    %128 = vmatprep.subr.mxu0 0.0
    %129 = vmatpush2.msra.mxu0 0.0
    %130 = vmatprep.subr.mxu0 0.0
    %131 = vmatpush2.msra.mxu0 0.0
    %132 = vmatprep.subr.mxu0 0.0
    %133 = vmatpush2.msra.mxu0 0.0
    %134 = vmatprep.subr.mxu0 0.0
    %135 = vmatpush2.msra.mxu0 0.0
    %136 = vmatprep.subr.mxu0 0.0
    %137 = vmatpush2.msra.mxu0 0.0
    %138 = vmatprep.mubr.f32.mxu0 0.0
    %139 = vmatmul.mubr.f32.gmra.mxu0 %v28
    %v140 = vpop.f32.mrf.mxu0
    %v141 = vadd.f32 %v67, %v140
    %v142 = vpop.f32.mrf.mxu0
    %v143 = vadd.f32 %v71, %v142
    %144 = vmatprep.mubr.f32.mxu0 0.0
    %145 = vmatmul.mubr.f32.gmra.mxu0 %v29
    %v146 = vpop.f32.mrf.mxu0
    %v147 = vadd.f32 %v67, %v146
    %v148 = vpop.f32.mrf.mxu0
    %v149 = vadd.f32 %v71, %v148
    %150 = vdwg.mxu0
    %v151 = vmul.f32 %v143, 0.5
    %v152 = vmul.f32 %v149, 0.5
    %v153 = vmul.f32 %v143, 0.70710677
    %v154 = vmul.f32 %v149, 0.70710677
    %v155 = verf.f32.pop %v153
    %v156 = verf.f32.pop %v154
    %v157 = vadd.f32 %v155, 1.0
    %v158 = vadd.f32 %v156, 1.0
    %v159 = vmul.f32 %v151, %v157
    %v160 = vmul.f32 %v152, %v158
    %v161 = vmul.f32 %v141, %v159
    %v162 = vmul.f32 %v147, %v160
    %163 = vst [vmem:[%s3] sm:$0xff] %v161
    %164 = vst [vmem:[%s3 + $0x8] sm:$0xff] %v162
    // Predicated region
    $region18: #{_geglu_impl.1} parent=1 // pred_check
      _
    $region19: #{_geglu_impl.1} parent=1 // pred_check_branch
      %166 = sbr.rel (0) target = $region21
    $region20: #{_geglu_impl.1} parent=1 // pred_region
      _
    $region21: #{_geglu_impl.1} parent=1 // pred_fallthru
      _
    // Predicated region
    $region22: #{_geglu_impl.1} parent=1 // pred_check
      _
    $region23: #{_geglu_impl.1} parent=1 // pred_check_branch
      %168 = sbr.rel (0) target = $region25
    $region24: #{_geglu_impl.1} parent=1 // pred_region
      _
    $region25: #{_geglu_impl.1} parent=1 // pred_fallthru
      _
    %169 = vsyncpa [#allocation3], 1

</llo_original>
